<compile_context>
chip_gen: v5e
topology: v5e:2x2
jax: 0.10.0
libtpu: 0.0.40
codegen_flags: <defaults>
</compile_context>

<pallas_src>
import jax
import jax.numpy as jnp
from jax.experimental import pallas as pl
from jax.experimental.pallas import tpu as pltpu

LANE = 128


def _round_up(n, m):
    return ((n + m - 1) // m) * m


def _leaky_relu(v, slope=0.1):
    # Single VPU max (valid for 0 < slope < 1) instead of compare+select.
    return jnp.maximum(v, slope * v)


def _disc_kernel(x_ref,
                 w1_ref, b1_ref,
                 w2_ref, b2_ref,
                 w3_ref, b3_ref,
                 w4_ref, b4_ref,
                 o_ref):
    """Whole 4-layer MLP for one batch tile, entirely in VMEM.

    Matmuls run on the MXU in bf16 with f32 accumulation; bias adds and
    LeakyReLU run on the VPU.  All feature dims are 128-lane padded.
    """
    x = x_ref[...]  # bf16 (tile, in)

    # Linear(input_size, hidden)
    h = jnp.dot(x, w1_ref[...], preferred_element_type=jnp.float32) + b1_ref[...]
    # Linear(hidden, 512) + LeakyReLU(0.1)
    h = jnp.dot(h.astype(jnp.bfloat16), w2_ref[...],
                preferred_element_type=jnp.float32) + b2_ref[...]
    h = _leaky_relu(h)
    # Linear(512, hidden) + LeakyReLU(0.1)
    h = jnp.dot(h.astype(jnp.bfloat16), w3_ref[...],
                preferred_element_type=jnp.float32) + b3_ref[...]
    h = _leaky_relu(h)
    # Linear(hidden, output_size)
    h = jnp.dot(h.astype(jnp.bfloat16), w4_ref[...],
                preferred_element_type=jnp.float32) + b4_ref[...]

    o_ref[...] = h.astype(o_ref.dtype)


def prepare_padded_params(params, input_size, hidden_size, output_size):
    """Zero-pad the narrow feature dims to 128 lanes and cast weights to bf16.

    Padding with zeros is exact: padded hidden columns get 0 weight and 0
    bias, contribute 0 to downstream matmuls, and LeakyReLU(0) == 0.
    """
    hp = _round_up(hidden_size, LANE)
    op = _round_up(output_size, LANE)
    mid = 512  # already a multiple of 128

    def pad_w(w, shape):
        out = jnp.zeros(shape, jnp.float32)
        out = out.at[:w.shape[0], :w.shape[1]].set(w)
        return out.astype(jnp.bfloat16)

    def pad_b(b, cols):
        out = jnp.zeros((1, cols), jnp.float32)
        return out.at[:, :b.shape[1]].set(b)

    return {
        "w1": pad_w(params["w1"], (input_size, hp)), "b1": pad_b(params["b1"], hp),
        "w2": pad_w(params["w2"], (hp, mid)),        "b2": pad_b(params["b2"], mid),
        "w3": pad_w(params["w3"], (mid, hp)),        "b3": pad_b(params["b3"], hp),
        "w4": pad_w(params["w4"], (hp, op)),         "b4": pad_b(params["b4"], op),
    }


def discriminator1_forward(x, padded_params, output_size, *, batch_tile=None):
    """Run the Discriminator1 MLP with a Pallas kernel.

    x: (B, input_size) float32 (cast to bf16 for the MXU inside the wrapper)
    padded_params: output of prepare_padded_params (bf16 weights, f32 biases)
    """
    B, input_size = x.shape
    op = padded_params["w4"].shape[1]
    hp = padded_params["w1"].shape[1]

    if batch_tile is None:
        # Fat tiles amortize the ~0.35us/step overhead; the 512 cap keeps the
        # (tile, 512) f32 intermediate + double-buffered x/out small enough
        # for v7x's 64 MiB VMEM, and guarantees >= 2 parallel grid steps
        # (both v7x TensorCores) once B > 512.
        batch_tile = min(512, _round_up(B, 8))
    B_pad = _round_up(B, batch_tile)

    x_bf16 = x.astype(jnp.bfloat16)
    if B_pad != B:
        x_bf16 = jnp.pad(x_bf16, ((0, B_pad - B), (0, 0)))

    # Resident (constant-index) weight/bias blocks.
    full = lambda arr: pl.BlockSpec(arr.shape, lambda i: (0, 0))

    grid_spec = pltpu.PrefetchScalarGridSpec(
        num_scalar_prefetch=0,
        grid=(B_pad // batch_tile,),
        in_specs=[
            pl.BlockSpec((batch_tile, input_size), lambda i: (i, 0)),
            full(padded_params["w1"]), full(padded_params["b1"]),
            full(padded_params["w2"]), full(padded_params["b2"]),
            full(padded_params["w3"]), full(padded_params["b3"]),
            full(padded_params["w4"]), full(padded_params["b4"]),
        ],
        out_specs=pl.BlockSpec((batch_tile, op), lambda i: (i, 0)),
    )

    flops = 2 * B_pad * (input_size * hp + hp * 512 + 512 * hp + hp * op)
    bytes_accessed = (
        x_bf16.size * 2
        + sum(int(v.size) * v.dtype.itemsize for v in padded_params.values())
        + B_pad * op * 4)

    out = pl.pallas_call(
        _disc_kernel,
        out_shape=jax.ShapeDtypeStruct((B_pad, op), jnp.float32),
        grid_spec=grid_spec,
        compiler_params=pltpu.CompilerParams(
            dimension_semantics=("parallel",)),
        cost_estimate=pl.CostEstimate(
            flops=flops, transcendentals=0, bytes_accessed=bytes_accessed),
    )(x_bf16,
      padded_params["w1"], padded_params["b1"],
      padded_params["w2"], padded_params["b2"],
      padded_params["w3"], padded_params["b3"],
      padded_params["w4"], padded_params["b4"])

    # Slice the real batch rows and output columns back out.
    return out[:B, :output_size]


def init_params(key, input_size, hidden_size, output_size):
    """Deterministic init mimicking nn.Linear default: U(-1/sqrt(fan_in), +)."""
    dims = [(input_size, hidden_size),
            (hidden_size, 512),
            (512, hidden_size),
            (hidden_size, output_size)]
    params = {}
    for idx, (fan_in, fan_out) in enumerate(dims, start=1):
        key, kw, kb = jax.random.split(key, 3)
        bound = 1.0 / jnp.sqrt(jnp.float32(fan_in))
        params[f"w{idx}"] = jax.random.uniform(
            kw, (fan_in, fan_out), jnp.float32, minval=-bound, maxval=bound)
        params[f"b{idx}"] = jax.random.uniform(
            kb, (1, fan_out), jnp.float32, minval=-bound, maxval=bound)
    return params


def reference_forward(x, params):
    """Pure-f32 reference matching the PyTorch module semantics."""
    h = x @ params["w1"] + params["b1"]
    h = h @ params["w2"] + params["b2"]
    h = jnp.where(h > 0, h, 0.1 * h)
    h = h @ params["w3"] + params["b3"]
    h = jnp.where(h > 0, h, 0.1 * h)
    h = h @ params["w4"] + params["b4"]
    return h


if __name__ == "__main__":
    # Small shapes implied by the module: input_size=64, hidden_size=32,
    # output_size=1, batch=8.
    batch, input_size, hidden_size, output_size = 8, 64, 32, 1

    key = jax.random.PRNGKey(0)
    key, kx = jax.random.split(key)
    x = jax.random.normal(kx, (batch, input_size), dtype=jnp.float32)
    params = init_params(key, input_size, hidden_size, output_size)

    padded = prepare_padded_params(params, input_size, hidden_size, output_size)
    out = discriminator1_forward(x, padded, output_size)
    out = jax.block_until_ready(out)

    ref = reference_forward(x, params)
    assert out.shape == (batch, output_size)
    # bf16 MXU inputs vs pure-f32 reference: allow ~1% tolerance.
    assert jnp.allclose(out, ref, atol=2e-2, rtol=2e-2), "mismatch vs reference"

    print("KERNEL_OK")
</pallas_src>

<mosaic_0001>
module attributes {stable_mosaic.version = 11 : i64} {
  func.func @_disc_kernel(%arg0: i32, %arg1: memref<8x64xbf16, #tpu.memory_space<vmem>>, %arg2: memref<64x128xbf16, #tpu.memory_space<vmem>>, %arg3: memref<1x128xf32, #tpu.memory_space<vmem>>, %arg4: memref<128x512xbf16, #tpu.memory_space<vmem>>, %arg5: memref<1x512xf32, #tpu.memory_space<vmem>>, %arg6: memref<512x128xbf16, #tpu.memory_space<vmem>>, %arg7: memref<1x128xf32, #tpu.memory_space<vmem>>, %arg8: memref<128x128xbf16, #tpu.memory_space<vmem>>, %arg9: memref<1x128xf32, #tpu.memory_space<vmem>>, %arg10: memref<8x128xf32, #tpu.memory_space<vmem>>) attributes {dimension_semantics = [#tpu.dimension_semantics<parallel>], iteration_bounds = array<i64: 1>, scalar_prefetch = 0 : i64, scratch_operands = 0 : i64, tpu.core_type = #tpu.core_type<tc>, window_params = [{transform_indices = @transform_0, window_bounds = array<i64: 8, 64>}, {pipeline_mode = #tpu.pipeline_mode<synchronous>, transform_indices = @transform_1, window_bounds = array<i64: 64, 128>}, {pipeline_mode = #tpu.pipeline_mode<synchronous>, transform_indices = @transform_2, window_bounds = array<i64: 1, 128>}, {pipeline_mode = #tpu.pipeline_mode<synchronous>, transform_indices = @transform_3, window_bounds = array<i64: 128, 512>}, {pipeline_mode = #tpu.pipeline_mode<synchronous>, transform_indices = @transform_4, window_bounds = array<i64: 1, 512>}, {pipeline_mode = #tpu.pipeline_mode<synchronous>, transform_indices = @transform_5, window_bounds = array<i64: 512, 128>}, {pipeline_mode = #tpu.pipeline_mode<synchronous>, transform_indices = @transform_6, window_bounds = array<i64: 1, 128>}, {pipeline_mode = #tpu.pipeline_mode<synchronous>, transform_indices = @transform_7, window_bounds = array<i64: 128, 128>}, {pipeline_mode = #tpu.pipeline_mode<synchronous>, transform_indices = @transform_8, window_bounds = array<i64: 1, 128>}, {transform_indices = @transform_9, window_bounds = array<i64: 8, 128>}]} {
    %c0 = arith.constant 0 : index
    %c0_0 = arith.constant 0 : index
    %0 = vector.load %arg1[%c0, %c0_0] : memref<8x64xbf16, #tpu.memory_space<vmem>>, vector<8x64xbf16>
    %c0_1 = arith.constant 0 : index
    %c0_2 = arith.constant 0 : index
    %1 = vector.load %arg2[%c0_1, %c0_2] : memref<64x128xbf16, #tpu.memory_space<vmem>>, vector<64x128xbf16>
    %cst = arith.constant dense<0.000000e+00> : vector<8x128xf32>
    %2 = tpu.matmul %0, %1, %cst {dimension_numbers = #tpu.dot_dimension_numbers<[1], [0], [0], [1], [0, 0, 1, 1], [], []>} : vector<8x64xbf16>, vector<64x128xbf16>, vector<8x128xf32> -> vector<8x128xf32>
    %c0_3 = arith.constant 0 : index
    %c0_4 = arith.constant 0 : index
    %3 = vector.load %arg3[%c0_3, %c0_4] : memref<1x128xf32, #tpu.memory_space<vmem>>, vector<1x128xf32>
    %4 = vector.broadcast %3 : vector<1x128xf32> to vector<8x128xf32>
    %5 = arith.addf %2, %4 : vector<8x128xf32>
    %6 = arith.truncf %5 : vector<8x128xf32> to vector<8x128xbf16>
    %c0_5 = arith.constant 0 : index
    %c0_6 = arith.constant 0 : index
    %7 = vector.load %arg4[%c0_5, %c0_6] : memref<128x512xbf16, #tpu.memory_space<vmem>>, vector<128x512xbf16>
    %cst_7 = arith.constant dense<0.000000e+00> : vector<8x512xf32>
    %8 = tpu.matmul %6, %7, %cst_7 {dimension_numbers = #tpu.dot_dimension_numbers<[1], [0], [0], [1], [0, 0, 1, 1], [], []>} : vector<8x128xbf16>, vector<128x512xbf16>, vector<8x512xf32> -> vector<8x512xf32>
    %c0_8 = arith.constant 0 : index
    %c0_9 = arith.constant 0 : index
    %9 = vector.load %arg5[%c0_8, %c0_9] : memref<1x512xf32, #tpu.memory_space<vmem>>, vector<1x512xf32>
    %10 = vector.broadcast %9 : vector<1x512xf32> to vector<8x512xf32>
    %11 = arith.addf %8, %10 : vector<8x512xf32>
    %cst_10 = arith.constant 1.000000e-01 : f32
    %12 = vector.broadcast %cst_10 : f32 to vector<8x512xf32>
    %13 = arith.mulf %12, %11 : vector<8x512xf32>
    %14 = arith.maximumf %11, %13 : vector<8x512xf32>
    %15 = arith.truncf %14 : vector<8x512xf32> to vector<8x512xbf16>
    %c0_11 = arith.constant 0 : index
    %c0_12 = arith.constant 0 : index
    %16 = vector.load %arg6[%c0_11, %c0_12] : memref<512x128xbf16, #tpu.memory_space<vmem>>, vector<512x128xbf16>
    %cst_13 = arith.constant dense<0.000000e+00> : vector<8x128xf32>
    %17 = tpu.matmul %15, %16, %cst_13 {dimension_numbers = #tpu.dot_dimension_numbers<[1], [0], [0], [1], [0, 0, 1, 1], [], []>} : vector<8x512xbf16>, vector<512x128xbf16>, vector<8x128xf32> -> vector<8x128xf32>
    %c0_14 = arith.constant 0 : index
    %c0_15 = arith.constant 0 : index
    %18 = vector.load %arg7[%c0_14, %c0_15] : memref<1x128xf32, #tpu.memory_space<vmem>>, vector<1x128xf32>
    %19 = vector.broadcast %18 : vector<1x128xf32> to vector<8x128xf32>
    %20 = arith.addf %17, %19 : vector<8x128xf32>
    %cst_16 = arith.constant 1.000000e-01 : f32
    %21 = vector.broadcast %cst_16 : f32 to vector<8x128xf32>
    %22 = arith.mulf %21, %20 : vector<8x128xf32>
    %23 = arith.maximumf %20, %22 : vector<8x128xf32>
    %24 = arith.truncf %23 : vector<8x128xf32> to vector<8x128xbf16>
    %c0_17 = arith.constant 0 : index
    %c0_18 = arith.constant 0 : index
    %25 = vector.load %arg8[%c0_17, %c0_18] : memref<128x128xbf16, #tpu.memory_space<vmem>>, vector<128x128xbf16>
    %cst_19 = arith.constant dense<0.000000e+00> : vector<8x128xf32>
    %26 = tpu.matmul %24, %25, %cst_19 {dimension_numbers = #tpu.dot_dimension_numbers<[1], [0], [0], [1], [0, 0, 1, 1], [], []>} : vector<8x128xbf16>, vector<128x128xbf16>, vector<8x128xf32> -> vector<8x128xf32>
    %c0_20 = arith.constant 0 : index
    %c0_21 = arith.constant 0 : index
    %27 = vector.load %arg9[%c0_20, %c0_21] : memref<1x128xf32, #tpu.memory_space<vmem>>, vector<1x128xf32>
    %28 = vector.broadcast %27 : vector<1x128xf32> to vector<8x128xf32>
    %29 = arith.addf %26, %28 : vector<8x128xf32>
    %c0_22 = arith.constant 0 : index
    %c0_23 = arith.constant 0 : index
    %30 = vector.load %arg10[%c0_22, %c0_23] : memref<8x128xf32, #tpu.memory_space<vmem>>, vector<8x128xf32>
    tpu.vector_store %arg10[%c0_22, %c0_23], %29 {strides = array<i32>} : memref<8x128xf32, #tpu.memory_space<vmem>>, vector<8x128xf32>,
    return
  }
  func.func @transform_0(%arg0: i32) -> (i32, i32) {
    %c0_i32 = arith.constant 0 : i32
    %c0_i32_0 = arith.constant 0 : i32
    return %arg0, %c0_i32 : i32, i32
  }
  func.func @transform_1(%arg0: i32) -> (i32, i32) {
    %c0_i32 = arith.constant 0 : i32
    %c0_i32_0 = arith.constant 0 : i32
    %c0_i32_1 = arith.constant 0 : i32
    return %c0_i32, %c0_i32_0 : i32, i32
  }
  func.func @transform_2(%arg0: i32) -> (i32, i32) {
    %c0_i32 = arith.constant 0 : i32
    %c0_i32_0 = arith.constant 0 : i32
    %c0_i32_1 = arith.constant 0 : i32
    return %c0_i32, %c0_i32_0 : i32, i32
  }
  func.func @transform_3(%arg0: i32) -> (i32, i32) {
    %c0_i32 = arith.constant 0 : i32
    %c0_i32_0 = arith.constant 0 : i32
    %c0_i32_1 = arith.constant 0 : i32
    return %c0_i32, %c0_i32_0 : i32, i32
  }
  func.func @transform_4(%arg0: i32) -> (i32, i32) {
    %c0_i32 = arith.constant 0 : i32
    %c0_i32_0 = arith.constant 0 : i32
    %c0_i32_1 = arith.constant 0 : i32
    return %c0_i32, %c0_i32_0 : i32, i32
  }
  func.func @transform_5(%arg0: i32) -> (i32, i32) {
    %c0_i32 = arith.constant 0 : i32
    %c0_i32_0 = arith.constant 0 : i32
    %c0_i32_1 = arith.constant 0 : i32
    return %c0_i32, %c0_i32_0 : i32, i32
  }
  func.func @transform_6(%arg0: i32) -> (i32, i32) {
    %c0_i32 = arith.constant 0 : i32
    %c0_i32_0 = arith.constant 0 : i32
    %c0_i32_1 = arith.constant 0 : i32
    return %c0_i32, %c0_i32_0 : i32, i32
  }
  func.func @transform_7(%arg0: i32) -> (i32, i32) {
    %c0_i32 = arith.constant 0 : i32
    %c0_i32_0 = arith.constant 0 : i32
    %c0_i32_1 = arith.constant 0 : i32
    return %c0_i32, %c0_i32_0 : i32, i32
  }
  func.func @transform_8(%arg0: i32) -> (i32, i32) {
    %c0_i32 = arith.constant 0 : i32
    %c0_i32_0 = arith.constant 0 : i32
    %c0_i32_1 = arith.constant 0 : i32
    return %c0_i32, %c0_i32_0 : i32, i32
  }
  func.func @transform_9(%arg0: i32) -> (i32, i32) {
    %c0_i32 = arith.constant 0 : i32
    %c0_i32_0 = arith.constant 0 : i32
    return %arg0, %c0_i32 : i32, i32
  }
}

</mosaic_0001>

<llo_original>
// kernel: tpu_custom_call.1
$region0: #{tpu_custom_call.1}
  #allocation0 [shape = 'u32[]', space=smem, size = 0x4, offset = 0x4, fixed_abs, tag = 'smem constant byte address 0x4 - core index']
  #allocation1 [shape = 'u32[72,128]{1,0:T(1,128)}', space=vmem, size = 0x9000, scoped, tag = 'internal scratch']
  %s0 = inlined_call_operand.hbm [shape: bf16[8,64], index: 0, kind: input, shape index: {}]
  %s1 = inlined_call_operand.hbm [shape: bf16[64,128], index: 1, kind: input, shape index: {}]
  %s2 = inlined_call_operand.vmem [shape: f32[1,128], index: 2, kind: input, shape index: {}]
  %s3 = inlined_call_operand.hbm [shape: bf16[128,512], index: 3, kind: input, shape index: {}]
  %s4 = inlined_call_operand.hbm [shape: f32[1,512], index: 4, kind: input, shape index: {}]
  %s5 = inlined_call_operand.hbm [shape: bf16[512,128], index: 5, kind: input, shape index: {}]
  %s6 = inlined_call_operand.vmem [shape: f32[1,128], index: 6, kind: input, shape index: {}]
  %s7 = inlined_call_operand.hbm [shape: bf16[128,128], index: 7, kind: input, shape index: {}]
  %s8 = inlined_call_operand.vmem [shape: f32[1,128], index: 8, kind: input, shape index: {}]
  %s9 = inlined_call_operand.hbm [shape: f32[8,128], index: 9, kind: output, shape index: {}]
  %s10 = sld [smem:[#allocation0]]
  $region70: #{tpu_custom_call.1} parent=0
    _
  %s12 = ssub.s32 1, %s10
  %s13 = scalar_select 0, %s12, %s10
  $region1: #{tpu_custom_call.1} parent=0
    #allocation2 [shape = 'u8[2048]{0}', space=vmem, size = 0x800, scoped, tag = 'input window, operand 0, single buffered']
    #allocation3 [shape = 's32[1]{0}', space=sflag, size = 0x4, scoped, tag = 'scoped memory for tpu_custom_call.1']
    #allocation4 [shape = 's32[1]{0}', space=sflag, size = 0x4, scoped, tag = 'scoped memory for tpu_custom_call.1']
    #allocation5 [shape = 'u8[16384]{0}', space=vmem, size = 0x4000, scoped, tag = 'input window, operand 1, single buffered']
    #allocation6 [shape = 's32[1]{0}', space=sflag, size = 0x4, scoped, tag = 'scoped memory for tpu_custom_call.1']
    #allocation7 [shape = 'u8[131072]{0}', space=vmem, size = 0x20000, scoped, tag = 'input window, operand 3, single buffered']
    #allocation8 [shape = 'u8[2048]{0}', space=vmem, size = 0x800, scoped, tag = 'input window, operand 4, single buffered']
    #allocation9 [shape = 's32[1]{0}', space=sflag, size = 0x4, scoped, tag = 'scoped memory for tpu_custom_call.1']
    #allocation10 [shape = 'u8[131072]{0}', space=vmem, size = 0x20000, scoped, tag = 'input window, operand 5, single buffered']
    #allocation11 [shape = 'u8[32768]{0}', space=vmem, size = 0x8000, scoped, tag = 'input window, operand 7, single buffered']
    #allocation12 [shape = 's32[1]{0}', space=sflag, size = 0x4, scoped, tag = 'scoped memory for tpu_custom_call.1']
    #allocation13 [shape = 'u8[4096]{0}', space=vmem, size = 0x1000, scoped, tag = 'output window, operand 0, single buffered']
    %14 = vsyncpa [#allocation3], 0
    %15 = vsyncpa [#allocation6], 0
    %16 = vsyncpa [#allocation9], 0
    %17 = vsyncpa [#allocation12], 0
    %18 = vsyncpa [#allocation4], 0
    // Predicated region
    $region2: #{tpu_custom_call.1} parent=1 // pred_check
      _
    $region3: #{tpu_custom_call.1} parent=1 // pred_check_branch
      %20 = sbr.rel (0) target = $region5
    $region4: #{tpu_custom_call.1} parent=1 // pred_region
      %22 = vsyncadd [#allocation3], 0
      %s24 = sshll.u32 %s0, 4
      %s25 = int_to_ptr.hbm [resolvable:$true] %s24
      %s26 = sshll.u32 [#allocation2], 4
      %s27 = int_to_ptr.vmem [resolvable:$true] %s26
      %29 = dma.hbm_to_vmem [thread:$0]  %s25, 64, %s27, [#allocation3]
    $region5: #{tpu_custom_call.1} parent=1 // pred_fallthru
      _
    // Predicated region
    $region6: #{tpu_custom_call.1} parent=1 // pred_check
      _
    $region7: #{tpu_custom_call.1} parent=1 // pred_check_branch
      %31 = sbr.rel (0) target = $region9
    $region8: #{tpu_custom_call.1} parent=1 // pred_region
      %33 = vsyncadd [#allocation6], 0
      %s34 = sshll.u32 %s1, 4
      %s35 = int_to_ptr.hbm [resolvable:$true] %s34
      %s36 = sshll.u32 [#allocation5], 4
      %s37 = int_to_ptr.vmem [resolvable:$true] %s36
      %42 = dma.hbm_to_vmem [thread:$0]  %s35, 512, %s37, [#allocation6], 64, 64, 4
    $region9: #{tpu_custom_call.1} parent=1 // pred_fallthru
      _
    // Predicated region
    $region10: #{tpu_custom_call.1} parent=1 // pred_check
      _
    $region11: #{tpu_custom_call.1} parent=1 // pred_check_branch
      %44 = sbr.rel (0) target = $region13
    $region12: #{tpu_custom_call.1} parent=1 // pred_region
      _
    $region13: #{tpu_custom_call.1} parent=1 // pred_fallthru
      _
    // Predicated region
    $region14: #{tpu_custom_call.1} parent=1 // pred_check
      _
    $region15: #{tpu_custom_call.1} parent=1 // pred_check_branch
      %46 = sbr.rel (0) target = $region17
    $region16: #{tpu_custom_call.1} parent=1 // pred_region
      %48 = vsyncadd [#allocation6], 0
      %s49 = sshll.u32 %s3, 4
      %s50 = int_to_ptr.hbm [resolvable:$true] %s49
      %s51 = sshll.u32 [#allocation7], 4
      %s52 = int_to_ptr.vmem [resolvable:$true] %s51
      %57 = dma.hbm_to_vmem [thread:$0]  %s50, 4096, %s52, [#allocation6], 256, 256, 16
    $region17: #{tpu_custom_call.1} parent=1 // pred_fallthru
      _
    // Predicated region
    $region18: #{tpu_custom_call.1} parent=1 // pred_check
      _
    $region19: #{tpu_custom_call.1} parent=1 // pred_check_branch
      %59 = sbr.rel (0) target = $region21
    $region20: #{tpu_custom_call.1} parent=1 // pred_region
      %61 = vsyncadd [#allocation9], 0
      %s63 = sshll.u32 %s4, 4
      %s64 = int_to_ptr.hbm [resolvable:$true] %s63
      %s65 = sshll.u32 [#allocation8], 4
      %s66 = int_to_ptr.vmem [resolvable:$true] %s65
      %68 = dma.hbm_to_vmem [thread:$0]  %s64, 64, %s66, [#allocation9]
    $region21: #{tpu_custom_call.1} parent=1 // pred_fallthru
      _
    // Predicated region
    $region22: #{tpu_custom_call.1} parent=1 // pred_check
      _
    $region23: #{tpu_custom_call.1} parent=1 // pred_check_branch
      %70 = sbr.rel (0) target = $region25
    $region24: #{tpu_custom_call.1} parent=1 // pred_region
      %72 = vsyncadd [#allocation9], 0
      %s73 = sshll.u32 %s5, 4
      %s74 = int_to_ptr.hbm [resolvable:$true] %s73
      %s75 = sshll.u32 [#allocation10], 4
      %s76 = int_to_ptr.vmem [resolvable:$true] %s75
      %81 = dma.hbm_to_vmem [thread:$0]  %s74, 4096, %s76, [#allocation9], 64, 64, 4
    $region25: #{tpu_custom_call.1} parent=1 // pred_fallthru
      _
    // Predicated region
    $region26: #{tpu_custom_call.1} parent=1 // pred_check
      _
    $region27: #{tpu_custom_call.1} parent=1 // pred_check_branch
      %83 = sbr.rel (0) target = $region29
    $region28: #{tpu_custom_call.1} parent=1 // pred_region
      _
    $region29: #{tpu_custom_call.1} parent=1 // pred_fallthru
      _
    // Predicated region
    $region30: #{tpu_custom_call.1} parent=1 // pred_check
      _
    $region31: #{tpu_custom_call.1} parent=1 // pred_check_branch
      %85 = sbr.rel (0) target = $region33
    $region32: #{tpu_custom_call.1} parent=1 // pred_region
      %87 = vsyncadd [#allocation12], 0
      %s88 = sshll.u32 %s7, 4
      %s89 = int_to_ptr.hbm [resolvable:$true] %s88
      %s90 = sshll.u32 [#allocation11], 4
      %s91 = int_to_ptr.vmem [resolvable:$true] %s90
      %96 = dma.hbm_to_vmem [thread:$0]  %s89, 1024, %s91, [#allocation12], 64, 64, 4
    $region33: #{tpu_custom_call.1} parent=1 // pred_fallthru
      _
    // Predicated region
    $region34: #{tpu_custom_call.1} parent=1 // pred_check
      _
    $region35: #{tpu_custom_call.1} parent=1 // pred_check_branch
      %98 = sbr.rel (0) target = $region37
    $region36: #{tpu_custom_call.1} parent=1 // pred_region
      _
    $region37: #{tpu_custom_call.1} parent=1 // pred_fallthru
      _
    // Predicated region
    $region38: #{tpu_custom_call.1} parent=1 // pred_check
      _
    $region39: #{tpu_custom_call.1} parent=1 // pred_check_branch
      %100 = sbr.rel (0) target = $region41
    $region40: #{tpu_custom_call.1} parent=1 // pred_region
      %102 = dma.done [#allocation3], 64
    $region41: #{tpu_custom_call.1} parent=1 // pred_fallthru
      _
    // Predicated region
    $region42: #{tpu_custom_call.1} parent=1 // pred_check
      _
    $region43: #{tpu_custom_call.1} parent=1 // pred_check_branch
      %104 = sbr.rel (0) target = $region45
    $region44: #{tpu_custom_call.1} parent=1 // pred_region
      %106 = dma.done [#allocation6], 512
    $region45: #{tpu_custom_call.1} parent=1 // pred_fallthru
      _
    // Predicated region
    $region46: #{tpu_custom_call.1} parent=1 // pred_check
      _
    $region47: #{tpu_custom_call.1} parent=1 // pred_check_branch
      %108 = sbr.rel (0) target = $region49
    $region48: #{tpu_custom_call.1} parent=1 // pred_region
      %110 = dma.done [#allocation6], 4096
    $region49: #{tpu_custom_call.1} parent=1 // pred_fallthru
      _
    // Predicated region
    $region50: #{tpu_custom_call.1} parent=1 // pred_check
      _
    $region51: #{tpu_custom_call.1} parent=1 // pred_check_branch
      %112 = sbr.rel (0) target = $region53
    $region52: #{tpu_custom_call.1} parent=1 // pred_region
      %114 = dma.done [#allocation9], 64
    $region53: #{tpu_custom_call.1} parent=1 // pred_fallthru
      _
    // Predicated region
    $region54: #{tpu_custom_call.1} parent=1 // pred_check
      _
    $region55: #{tpu_custom_call.1} parent=1 // pred_check_branch
      %116 = sbr.rel (0) target = $region57
    $region56: #{tpu_custom_call.1} parent=1 // pred_region
      %118 = dma.done [#allocation9], 4096
    $region57: #{tpu_custom_call.1} parent=1 // pred_fallthru
      _
    // Predicated region
    $region58: #{tpu_custom_call.1} parent=1 // pred_check
      _
    $region59: #{tpu_custom_call.1} parent=1 // pred_check_branch
      %120 = sbr.rel (0) target = $region61
    $region60: #{tpu_custom_call.1} parent=1 // pred_region
      %122 = dma.done [#allocation12], 1024
    $region61: #{tpu_custom_call.1} parent=1 // pred_fallthru
      _
    %v124 = vld [vmem:[#allocation2] sm:$0xf]
    %v125 = vld [vmem:[#allocation5] sm:$0xf]
    %v126 = vld [vmem:[#allocation5 + $0x4] sm:$0xf]
    %v127 = vld [vmem:[#allocation5 + $0x8] sm:$0xf]
    %v128 = vld [vmem:[#allocation5 + $0xc] sm:$0xf]
    %v129 = vld [vmem:[#allocation5 + $0x10] sm:$0xf]
    %v130 = vld [vmem:[#allocation5 + $0x14] sm:$0xf]
    %v131 = vld [vmem:[#allocation5 + $0x18] sm:$0xf]
    %v132 = vld [vmem:[#allocation5 + $0x1c] sm:$0xf]
    %v133 = vld [vmem:[%s2] sm:$0x1]
    %v135 = vperm.slane %v133, 0
    %v145 = vunpack.c.l.b16 %v125
    %v146 = vunpack.c.l.b16 %v126
    %v147 = vunpack.c.l.b16 %v127
    %v148 = vunpack.c.l.b16 %v128
    %v149 = vunpack.c.l.b16 %v129
    %v150 = vunpack.c.l.b16 %v130
    %v151 = vunpack.c.l.b16 %v131
    %v152 = vunpack.c.l.b16 %v132
    %v153 = vpack.c.b16 %v146, %v145
    %v154 = vpack.c.b16 %v148, %v147
    %v155 = vpack.c.b16 %v150, %v149
    %v156 = vpack.c.b16 %v152, %v151
    %vm161 = vcmask 523264
    %v163 = vsel %vm161, %v124, 0
    %165 = vmatpush.bf16.msra.mxu0 0
    %166 = vmatpush.bf16.msra.mxu0 0
    %167 = vmatpush.bf16.msra.mxu0 0
    %168 = vmatpush.bf16.msra.mxu0 0
    %169 = vmatpush.bf16.msra.mxu0 %v156
    %170 = vmatpush.bf16.msra.mxu0 %v155
    %171 = vmatpush.bf16.msra.mxu0 %v154
    %172 = vmatpush.bf16.msra.mxu0 %v153
    %173 = vmatmul.bf16.gmra.mxu0 %v163
    %v174 = vpop.f32.mrf.mxu0
    %v175 = vadd.f32 %v135, %v174
    %v176 = vpop.f32.mrf.mxu0
    %177 = vdwg.mxu0
    %v178 = vpack.c.bf16 %v175, %v175
    %v179 = vld [vmem:[#allocation7] sm:$0xff]
    %v180 = vld [vmem:[#allocation7 + $0x8] sm:$0xff]
    %v181 = vld [vmem:[#allocation7 + $0x10] sm:$0xff]
    %v182 = vld [vmem:[#allocation7 + $0x18] sm:$0xff]
    %v183 = vld [vmem:[#allocation7 + $0x20] sm:$0xff]
    %v184 = vld [vmem:[#allocation7 + $0x28] sm:$0xff]
    %v185 = vld [vmem:[#allocation7 + $0x30] sm:$0xff]
    %v186 = vld [vmem:[#allocation7 + $0x38] sm:$0xff]
    %v187 = vld [vmem:[#allocation7 + $0x40] sm:$0xff]
    %v188 = vld [vmem:[#allocation7 + $0x48] sm:$0xff]
    %v189 = vld [vmem:[#allocation7 + $0x50] sm:$0xff]
    %v190 = vld [vmem:[#allocation7 + $0x58] sm:$0xff]
    %v191 = vld [vmem:[#allocation7 + $0x60] sm:$0xff]
    %v192 = vld [vmem:[#allocation7 + $0x68] sm:$0xff]
    %v193 = vld [vmem:[#allocation7 + $0x70] sm:$0xff]
    %v194 = vld [vmem:[#allocation7 + $0x78] sm:$0xff]
    %v195 = vld [vmem:[#allocation7 + $0x80] sm:$0xff]
    %v196 = vld [vmem:[#allocation7 + $0x88] sm:$0xff]
    %v197 = vld [vmem:[#allocation7 + $0x90] sm:$0xff]
    %v198 = vld [vmem:[#allocation7 + $0x98] sm:$0xff]
    %v199 = vld [vmem:[#allocation7 + $0xa0] sm:$0xff]
    %v200 = vld [vmem:[#allocation7 + $0xa8] sm:$0xff]
    %v201 = vld [vmem:[#allocation7 + $0xb0] sm:$0xff]
    %v202 = vld [vmem:[#allocation7 + $0xb8] sm:$0xff]
    %v203 = vld [vmem:[#allocation7 + $0xc0] sm:$0xff]
    %v204 = vld [vmem:[#allocation7 + $0xc8] sm:$0xff]
    %v205 = vld [vmem:[#allocation7 + $0xd0] sm:$0xff]
    %v206 = vld [vmem:[#allocation7 + $0xd8] sm:$0xff]
    %v207 = vld [vmem:[#allocation7 + $0xe0] sm:$0xff]
    %v208 = vld [vmem:[#allocation7 + $0xe8] sm:$0xff]
    %v209 = vld [vmem:[#allocation7 + $0xf0] sm:$0xff]
    %v210 = vld [vmem:[#allocation7 + $0xf8] sm:$0xff]
    %v211 = vld [vmem:[#allocation8] sm:$0xf]
    %v213 = vperm.slane %v211, 0
    %v214 = vperm.slane %v211, 1
    %v215 = vperm.slane %v211, 2
    %v216 = vperm.slane %v211, 3
    %v253 = vunpack.c.l.b16 %v179
    %v254 = vunpack.c.h.b16 %v179
    %v255 = vunpack.c.l.b16 %v180
    %v256 = vunpack.c.h.b16 %v180
    %v257 = vunpack.c.l.b16 %v181
    %v258 = vunpack.c.h.b16 %v181
    %v259 = vunpack.c.l.b16 %v182
    %v260 = vunpack.c.h.b16 %v182
    %v261 = vunpack.c.l.b16 %v183
    %v262 = vunpack.c.h.b16 %v183
    %v263 = vunpack.c.l.b16 %v184
    %v264 = vunpack.c.h.b16 %v184
    %v265 = vunpack.c.l.b16 %v185
    %v266 = vunpack.c.h.b16 %v185
    %v267 = vunpack.c.l.b16 %v186
    %v268 = vunpack.c.h.b16 %v186
    %v269 = vunpack.c.l.b16 %v187
    %v270 = vunpack.c.h.b16 %v187
    %v271 = vunpack.c.l.b16 %v188
    %v272 = vunpack.c.h.b16 %v188
    %v273 = vunpack.c.l.b16 %v189
    %v274 = vunpack.c.h.b16 %v189
    %v275 = vunpack.c.l.b16 %v190
    %v276 = vunpack.c.h.b16 %v190
    %v277 = vunpack.c.l.b16 %v191
    %v278 = vunpack.c.h.b16 %v191
    %v279 = vunpack.c.l.b16 %v192
    %v280 = vunpack.c.h.b16 %v192
    %v281 = vunpack.c.l.b16 %v193
    %v282 = vunpack.c.h.b16 %v193
    %v283 = vunpack.c.l.b16 %v194
    %v284 = vunpack.c.h.b16 %v194
    %v285 = vunpack.c.l.b16 %v195
    %v286 = vunpack.c.h.b16 %v195
    %v287 = vunpack.c.l.b16 %v196
    %v288 = vunpack.c.h.b16 %v196
    %v289 = vunpack.c.l.b16 %v197
    %v290 = vunpack.c.h.b16 %v197
    %v291 = vunpack.c.l.b16 %v198
    %v292 = vunpack.c.h.b16 %v198
    %v293 = vunpack.c.l.b16 %v199
    %v294 = vunpack.c.h.b16 %v199
    %v295 = vunpack.c.l.b16 %v200
    %v296 = vunpack.c.h.b16 %v200
    %v297 = vunpack.c.l.b16 %v201
    %v298 = vunpack.c.h.b16 %v201
    %v299 = vunpack.c.l.b16 %v202
    %v300 = vunpack.c.h.b16 %v202
    %v301 = vunpack.c.l.b16 %v203
    %v302 = vunpack.c.h.b16 %v203
    %v303 = vunpack.c.l.b16 %v204
    %v304 = vunpack.c.h.b16 %v204
    %v305 = vunpack.c.l.b16 %v205
    %v306 = vunpack.c.h.b16 %v205
    %v307 = vunpack.c.l.b16 %v206
    %v308 = vunpack.c.h.b16 %v206
    %v309 = vunpack.c.l.b16 %v207
    %v310 = vunpack.c.h.b16 %v207
    %v311 = vunpack.c.l.b16 %v208
    %v312 = vunpack.c.h.b16 %v208
    %v313 = vunpack.c.l.b16 %v209
    %v314 = vunpack.c.h.b16 %v209
    %v315 = vunpack.c.l.b16 %v210
    %v316 = vunpack.c.h.b16 %v210
    %v317 = vpack.c.b16 %v257, %v253
    %v318 = vpack.c.b16 %v258, %v254
    %v319 = vpack.c.b16 %v259, %v255
    %v320 = vpack.c.b16 %v260, %v256
    %v321 = vpack.c.b16 %v265, %v261
    %v322 = vpack.c.b16 %v266, %v262
    %v323 = vpack.c.b16 %v267, %v263
    %v324 = vpack.c.b16 %v268, %v264
    %v325 = vpack.c.b16 %v273, %v269
    %v326 = vpack.c.b16 %v274, %v270
    %v327 = vpack.c.b16 %v275, %v271
    %v328 = vpack.c.b16 %v276, %v272
    %v329 = vpack.c.b16 %v281, %v277
    %v330 = vpack.c.b16 %v282, %v278
    %v331 = vpack.c.b16 %v283, %v279
    %v332 = vpack.c.b16 %v284, %v280
    %v333 = vpack.c.b16 %v289, %v285
    %v334 = vpack.c.b16 %v290, %v286
    %v335 = vpack.c.b16 %v291, %v287
    %v336 = vpack.c.b16 %v292, %v288
    %v337 = vpack.c.b16 %v297, %v293
    %v338 = vpack.c.b16 %v298, %v294
    %v339 = vpack.c.b16 %v299, %v295
    %v340 = vpack.c.b16 %v300, %v296
    %v341 = vpack.c.b16 %v305, %v301
    %v342 = vpack.c.b16 %v306, %v302
    %v343 = vpack.c.b16 %v307, %v303
    %v344 = vpack.c.b16 %v308, %v304
    %v345 = vpack.c.b16 %v313, %v309
    %v346 = vpack.c.b16 %v314, %v310
    %v347 = vpack.c.b16 %v315, %v311
    %v348 = vpack.c.b16 %v316, %v312
    %381 = vmatpush.bf16.msra.mxu0 %v345
    %382 = vmatpush.bf16.msra.mxu0 %v341
    %383 = vmatpush.bf16.msra.mxu0 %v337
    %384 = vmatpush.bf16.msra.mxu0 %v333
    %385 = vmatpush.bf16.msra.mxu0 %v329
    %386 = vmatpush.bf16.msra.mxu0 %v325
    %387 = vmatpush.bf16.msra.mxu0 %v321
    %388 = vmatpush.bf16.msra.mxu0 %v317
    %389 = vmatmul.bf16.gmra.mxu0 %v178
    %v390 = vpop.f32.mrf.mxu0
    %v391 = vadd.f32 %v213, %v390
    %v392 = vpop.f32.mrf.mxu0
    %393 = vdwg.mxu0
    %394 = vmatpush.bf16.msra.mxu0 %v346
    %395 = vmatpush.bf16.msra.mxu0 %v342
    %396 = vmatpush.bf16.msra.mxu0 %v338
    %397 = vmatpush.bf16.msra.mxu0 %v334
    %398 = vmatpush.bf16.msra.mxu0 %v330
    %399 = vmatpush.bf16.msra.mxu0 %v326
    %400 = vmatpush.bf16.msra.mxu0 %v322
    %401 = vmatpush.bf16.msra.mxu0 %v318
    %402 = vmatmul.bf16.gmra.mxu0 %v178
    %v403 = vpop.f32.mrf.mxu0
    %v404 = vadd.f32 %v214, %v403
    %v405 = vpop.f32.mrf.mxu0
    %406 = vdwg.mxu0
    %407 = vmatpush.bf16.msra.mxu0 %v347
    %408 = vmatpush.bf16.msra.mxu0 %v343
    %409 = vmatpush.bf16.msra.mxu0 %v339
    %410 = vmatpush.bf16.msra.mxu0 %v335
    %411 = vmatpush.bf16.msra.mxu0 %v331
    %412 = vmatpush.bf16.msra.mxu0 %v327
    %413 = vmatpush.bf16.msra.mxu0 %v323
    %414 = vmatpush.bf16.msra.mxu0 %v319
    %415 = vmatmul.bf16.gmra.mxu0 %v178
    %v416 = vpop.f32.mrf.mxu0
    %v417 = vadd.f32 %v215, %v416
    %v418 = vpop.f32.mrf.mxu0
    %419 = vdwg.mxu0
    %420 = vmatpush.bf16.msra.mxu0 %v348
    %421 = vmatpush.bf16.msra.mxu0 %v344
    %422 = vmatpush.bf16.msra.mxu0 %v340
    %423 = vmatpush.bf16.msra.mxu0 %v336
    %424 = vmatpush.bf16.msra.mxu0 %v332
    %425 = vmatpush.bf16.msra.mxu0 %v328
    %426 = vmatpush.bf16.msra.mxu0 %v324
    %427 = vmatpush.bf16.msra.mxu0 %v320
    %428 = vmatmul.bf16.gmra.mxu0 %v178
    %v429 = vpop.f32.mrf.mxu0
    %v430 = vadd.f32 %v216, %v429
    %v431 = vpop.f32.mrf.mxu0
    %432 = vdwg.mxu0
    %v433 = vmul.f32 %v391, 0.1
    %v434 = vmul.f32 %v404, 0.1
    %v435 = vmul.f32 %v417, 0.1
    %v436 = vmul.f32 %v430, 0.1
    %v437 = vmax.f32 %v391, %v433
    %v438 = vmax.f32 %v404, %v434
    %v439 = vmax.f32 %v417, %v435
    %v440 = vmax.f32 %v430, %v436
    %v441 = vpack.c.bf16 %v437, %v437
    %v442 = vpack.c.bf16 %v438, %v438
    %v443 = vpack.c.bf16 %v439, %v439
    %v444 = vpack.c.bf16 %v440, %v440
    %v445 = vld [vmem:[#allocation10] sm:$0xf]
    %v446 = vld [vmem:[#allocation10 + $0x4] sm:$0xf]
    %v447 = vld [vmem:[#allocation10 + $0x8] sm:$0xf]
    %v448 = vld [vmem:[#allocation10 + $0xc] sm:$0xf]
    %v449 = vld [vmem:[#allocation10 + $0x10] sm:$0xf]
    %v450 = vld [vmem:[#allocation10 + $0x14] sm:$0xf]
    %v451 = vld [vmem:[#allocation10 + $0x18] sm:$0xf]
    %v452 = vld [vmem:[#allocation10 + $0x1c] sm:$0xf]
    %v453 = vld [vmem:[#allocation10 + $0x20] sm:$0xf]
    %v454 = vld [vmem:[#allocation10 + $0x24] sm:$0xf]
    %v455 = vld [vmem:[#allocation10 + $0x28] sm:$0xf]
    %v456 = vld [vmem:[#allocation10 + $0x2c] sm:$0xf]
    %v457 = vld [vmem:[#allocation10 + $0x30] sm:$0xf]
    %v458 = vld [vmem:[#allocation10 + $0x34] sm:$0xf]
    %v459 = vld [vmem:[#allocation10 + $0x38] sm:$0xf]
    %v460 = vld [vmem:[#allocation10 + $0x3c] sm:$0xf]
    %v461 = vld [vmem:[#allocation10 + $0x40] sm:$0xf]
    %v462 = vld [vmem:[#allocation10 + $0x44] sm:$0xf]
    %v463 = vld [vmem:[#allocation10 + $0x48] sm:$0xf]
    %v464 = vld [vmem:[#allocation10 + $0x4c] sm:$0xf]
    %v465 = vld [vmem:[#allocation10 + $0x50] sm:$0xf]
    %v466 = vld [vmem:[#allocation10 + $0x54] sm:$0xf]
    %v467 = vld [vmem:[#allocation10 + $0x58] sm:$0xf]
    %v468 = vld [vmem:[#allocation10 + $0x5c] sm:$0xf]
    %v469 = vld [vmem:[#allocation10 + $0x60] sm:$0xf]
    %v470 = vld [vmem:[#allocation10 + $0x64] sm:$0xf]
    %v471 = vld [vmem:[#allocation10 + $0x68] sm:$0xf]
    %v472 = vld [vmem:[#allocation10 + $0x6c] sm:$0xf]
    %v473 = vld [vmem:[#allocation10 + $0x70] sm:$0xf]
    %v474 = vld [vmem:[#allocation10 + $0x74] sm:$0xf]
    %v475 = vld [vmem:[#allocation10 + $0x78] sm:$0xf]
    %v476 = vld [vmem:[#allocation10 + $0x7c] sm:$0xf]
    %v477 = vld [vmem:[#allocation10 + $0x80] sm:$0xf]
    %v478 = vld [vmem:[#allocation10 + $0x84] sm:$0xf]
    %v479 = vld [vmem:[#allocation10 + $0x88] sm:$0xf]
    %v480 = vld [vmem:[#allocation10 + $0x8c] sm:$0xf]
    %v481 = vld [vmem:[#allocation10 + $0x90] sm:$0xf]
    %v482 = vld [vmem:[#allocation10 + $0x94] sm:$0xf]
    %v483 = vld [vmem:[#allocation10 + $0x98] sm:$0xf]
    %v484 = vld [vmem:[#allocation10 + $0x9c] sm:$0xf]
    %v485 = vld [vmem:[#allocation10 + $0xa0] sm:$0xf]
    %v486 = vld [vmem:[#allocation10 + $0xa4] sm:$0xf]
    %v487 = vld [vmem:[#allocation10 + $0xa8] sm:$0xf]
    %v488 = vld [vmem:[#allocation10 + $0xac] sm:$0xf]
    %v489 = vld [vmem:[#allocation10 + $0xb0] sm:$0xf]
    %v490 = vld [vmem:[#allocation10 + $0xb4] sm:$0xf]
    %v491 = vld [vmem:[#allocation10 + $0xb8] sm:$0xf]
    %v492 = vld [vmem:[#allocation10 + $0xbc] sm:$0xf]
    %v493 = vld [vmem:[#allocation10 + $0xc0] sm:$0xf]
    %v494 = vld [vmem:[#allocation10 + $0xc4] sm:$0xf]
    %v495 = vld [vmem:[#allocation10 + $0xc8] sm:$0xf]
    %v496 = vld [vmem:[#allocation10 + $0xcc] sm:$0xf]
    %v497 = vld [vmem:[#allocation10 + $0xd0] sm:$0xf]
    %v498 = vld [vmem:[#allocation10 + $0xd4] sm:$0xf]
    %v499 = vld [vmem:[#allocation10 + $0xd8] sm:$0xf]
    %v500 = vld [vmem:[#allocation10 + $0xdc] sm:$0xf]
    %v501 = vld [vmem:[#allocation10 + $0xe0] sm:$0xf]
    %v502 = vld [vmem:[#allocation10 + $0xe4] sm:$0xf]
    %v503 = vld [vmem:[#allocation10 + $0xe8] sm:$0xf]
    %v504 = vld [vmem:[#allocation10 + $0xec] sm:$0xf]
    %v505 = vld [vmem:[#allocation10 + $0xf0] sm:$0xf]
    %v506 = vld [vmem:[#allocation10 + $0xf4] sm:$0xf]
    %v507 = vld [vmem:[#allocation10 + $0xf8] sm:$0xf]
    %v508 = vld [vmem:[#allocation10 + $0xfc] sm:$0xf]
    %v509 = vld [vmem:[%s6] sm:$0x1]
    %v511 = vperm.slane %v509, 0
    %v577 = vunpack.c.l.b16 %v445
    %v578 = vunpack.c.l.b16 %v446
    %v579 = vunpack.c.l.b16 %v447
    %v580 = vunpack.c.l.b16 %v448
    %v581 = vunpack.c.l.b16 %v449
    %v582 = vunpack.c.l.b16 %v450
    %v583 = vunpack.c.l.b16 %v451
    %v584 = vunpack.c.l.b16 %v452
    %v585 = vunpack.c.l.b16 %v453
    %v586 = vunpack.c.l.b16 %v454
    %v587 = vunpack.c.l.b16 %v455
    %v588 = vunpack.c.l.b16 %v456
    %v589 = vunpack.c.l.b16 %v457
    %v590 = vunpack.c.l.b16 %v458
    %v591 = vunpack.c.l.b16 %v459
    %v592 = vunpack.c.l.b16 %v460
    %v593 = vunpack.c.l.b16 %v461
    %v594 = vunpack.c.l.b16 %v462
    %v595 = vunpack.c.l.b16 %v463
    %v596 = vunpack.c.l.b16 %v464
    %v597 = vunpack.c.l.b16 %v465
    %v598 = vunpack.c.l.b16 %v466
    %v599 = vunpack.c.l.b16 %v467
    %v600 = vunpack.c.l.b16 %v468
    %v601 = vunpack.c.l.b16 %v469
    %v602 = vunpack.c.l.b16 %v470
    %v603 = vunpack.c.l.b16 %v471
    %v604 = vunpack.c.l.b16 %v472
    %v605 = vunpack.c.l.b16 %v473
    %v606 = vunpack.c.l.b16 %v474
    %v607 = vunpack.c.l.b16 %v475
    %v608 = vunpack.c.l.b16 %v476
    %v609 = vunpack.c.l.b16 %v477
    %v610 = vunpack.c.l.b16 %v478
    %v611 = vunpack.c.l.b16 %v479
    %v612 = vunpack.c.l.b16 %v480
    %v613 = vunpack.c.l.b16 %v481
    %v614 = vunpack.c.l.b16 %v482
    %v615 = vunpack.c.l.b16 %v483
    %v616 = vunpack.c.l.b16 %v484
    %v617 = vunpack.c.l.b16 %v485
    %v618 = vunpack.c.l.b16 %v486
    %v619 = vunpack.c.l.b16 %v487
    %v620 = vunpack.c.l.b16 %v488
    %v621 = vunpack.c.l.b16 %v489
    %v622 = vunpack.c.l.b16 %v490
    %v623 = vunpack.c.l.b16 %v491
    %v624 = vunpack.c.l.b16 %v492
    %v625 = vunpack.c.l.b16 %v493
    %v626 = vunpack.c.l.b16 %v494
    %v627 = vunpack.c.l.b16 %v495
    %v628 = vunpack.c.l.b16 %v496
    %v629 = vunpack.c.l.b16 %v497
    %v630 = vunpack.c.l.b16 %v498
    %v631 = vunpack.c.l.b16 %v499
    %v632 = vunpack.c.l.b16 %v500
    %v633 = vunpack.c.l.b16 %v501
    %v634 = vunpack.c.l.b16 %v502
    %v635 = vunpack.c.l.b16 %v503
    %v636 = vunpack.c.l.b16 %v504
    %v637 = vunpack.c.l.b16 %v505
    %v638 = vunpack.c.l.b16 %v506
    %v639 = vunpack.c.l.b16 %v507
    %v640 = vunpack.c.l.b16 %v508
    %v641 = vpack.c.b16 %v578, %v577
    %v642 = vpack.c.b16 %v580, %v579
    %v643 = vpack.c.b16 %v582, %v581
    %v644 = vpack.c.b16 %v584, %v583
    %v645 = vpack.c.b16 %v586, %v585
    %v646 = vpack.c.b16 %v588, %v587
    %v647 = vpack.c.b16 %v590, %v589
    %v648 = vpack.c.b16 %v592, %v591
    %v649 = vpack.c.b16 %v594, %v593
    %v650 = vpack.c.b16 %v596, %v595
    %v651 = vpack.c.b16 %v598, %v597
    %v652 = vpack.c.b16 %v600, %v599
    %v653 = vpack.c.b16 %v602, %v601
    %v654 = vpack.c.b16 %v604, %v603
    %v655 = vpack.c.b16 %v606, %v605
    %v656 = vpack.c.b16 %v608, %v607
    %v657 = vpack.c.b16 %v610, %v609
    %v658 = vpack.c.b16 %v612, %v611
    %v659 = vpack.c.b16 %v614, %v613
    %v660 = vpack.c.b16 %v616, %v615
    %v661 = vpack.c.b16 %v618, %v617
    %v662 = vpack.c.b16 %v620, %v619
    %v663 = vpack.c.b16 %v622, %v621
    %v664 = vpack.c.b16 %v624, %v623
    %v665 = vpack.c.b16 %v626, %v625
    %v666 = vpack.c.b16 %v628, %v627
    %v667 = vpack.c.b16 %v630, %v629
    %v668 = vpack.c.b16 %v632, %v631
    %v669 = vpack.c.b16 %v634, %v633
    %v670 = vpack.c.b16 %v636, %v635
    %v671 = vpack.c.b16 %v638, %v637
    %v672 = vpack.c.b16 %v640, %v639
    %705 = vmatpush.bf16.msra.mxu0 %v648
    %706 = vmatpush.bf16.msra.mxu0 %v647
    %707 = vmatpush.bf16.msra.mxu0 %v646
    %708 = vmatpush.bf16.msra.mxu0 %v645
    %709 = vmatpush.bf16.msra.mxu0 %v644
    %710 = vmatpush.bf16.msra.mxu0 %v643
    %711 = vmatpush.bf16.msra.mxu0 %v642
    %712 = vmatpush.bf16.msra.mxu0 %v641
    %713 = vmatmul.bf16.gmra.mxu0 %v441
    %v714 = vpop.f32.mrf.mxu0
    %v715 = vadd.f32 %v511, %v714
    %v716 = vpop.f32.mrf.mxu0
    %717 = vdwg.mxu0
    %718 = vmatpush.bf16.msra.mxu0 %v656
    %719 = vmatpush.bf16.msra.mxu0 %v655
    %720 = vmatpush.bf16.msra.mxu0 %v654
    %721 = vmatpush.bf16.msra.mxu0 %v653
    %722 = vmatpush.bf16.msra.mxu0 %v652
    %723 = vmatpush.bf16.msra.mxu0 %v651
    %724 = vmatpush.bf16.msra.mxu0 %v650
    %725 = vmatpush.bf16.msra.mxu0 %v649
    %726 = vmatmul.bf16.gmra.mxu0 %v442
    %v727 = vpop.f32.mrf.mxu0
    %v728 = vadd.f32 %v715, %v727
    %v729 = vpop.f32.mrf.mxu0
    %730 = vdwg.mxu0
    %731 = vmatpush.bf16.msra.mxu0 %v664
    %732 = vmatpush.bf16.msra.mxu0 %v663
    %733 = vmatpush.bf16.msra.mxu0 %v662
    %734 = vmatpush.bf16.msra.mxu0 %v661
    %735 = vmatpush.bf16.msra.mxu0 %v660
    %736 = vmatpush.bf16.msra.mxu0 %v659
    %737 = vmatpush.bf16.msra.mxu0 %v658
    %738 = vmatpush.bf16.msra.mxu0 %v657
    %739 = vmatmul.bf16.gmra.mxu0 %v443
    %v740 = vpop.f32.mrf.mxu0
    %v741 = vadd.f32 %v728, %v740
    %v742 = vpop.f32.mrf.mxu0
    %743 = vdwg.mxu0
    %744 = vmatpush.bf16.msra.mxu0 %v672
    %745 = vmatpush.bf16.msra.mxu0 %v671
    %746 = vmatpush.bf16.msra.mxu0 %v670
    %747 = vmatpush.bf16.msra.mxu0 %v669
    %748 = vmatpush.bf16.msra.mxu0 %v668
    %749 = vmatpush.bf16.msra.mxu0 %v667
    %750 = vmatpush.bf16.msra.mxu0 %v666
    %751 = vmatpush.bf16.msra.mxu0 %v665
    %752 = vmatmul.bf16.gmra.mxu0 %v444
    %v753 = vpop.f32.mrf.mxu0
    %v754 = vadd.f32 %v741, %v753
    %v755 = vpop.f32.mrf.mxu0
    %756 = vdwg.mxu0
    %v757 = vmul.f32 %v754, 0.1
    %v758 = vmax.f32 %v754, %v757
    %v759 = vpack.c.bf16 %v758, %v758
    %v760 = vld [vmem:[#allocation11] sm:$0xf]
    %v761 = vld [vmem:[#allocation11 + $0x4] sm:$0xf]
    %v762 = vld [vmem:[#allocation11 + $0x8] sm:$0xf]
    %v763 = vld [vmem:[#allocation11 + $0xc] sm:$0xf]
    %v764 = vld [vmem:[#allocation11 + $0x10] sm:$0xf]
    %v765 = vld [vmem:[#allocation11 + $0x14] sm:$0xf]
    %v766 = vld [vmem:[#allocation11 + $0x18] sm:$0xf]
    %v767 = vld [vmem:[#allocation11 + $0x1c] sm:$0xf]
    %v768 = vld [vmem:[#allocation11 + $0x20] sm:$0xf]
    %v769 = vld [vmem:[#allocation11 + $0x24] sm:$0xf]
    %v770 = vld [vmem:[#allocation11 + $0x28] sm:$0xf]
    %v771 = vld [vmem:[#allocation11 + $0x2c] sm:$0xf]
    %v772 = vld [vmem:[#allocation11 + $0x30] sm:$0xf]
    %v773 = vld [vmem:[#allocation11 + $0x34] sm:$0xf]
    %v774 = vld [vmem:[#allocation11 + $0x38] sm:$0xf]
    %v775 = vld [vmem:[#allocation11 + $0x3c] sm:$0xf]
    %v776 = vld [vmem:[%s8] sm:$0x1]
    %v778 = vperm.slane %v776, 0
    %v796 = vunpack.c.l.b16 %v760
    %v797 = vunpack.c.l.b16 %v761
    %v798 = vunpack.c.l.b16 %v762
    %v799 = vunpack.c.l.b16 %v763
    %v800 = vunpack.c.l.b16 %v764
    %v801 = vunpack.c.l.b16 %v765
    %v802 = vunpack.c.l.b16 %v766
    %v803 = vunpack.c.l.b16 %v767
    %v804 = vunpack.c.l.b16 %v768
    %v805 = vunpack.c.l.b16 %v769
    %v806 = vunpack.c.l.b16 %v770
    %v807 = vunpack.c.l.b16 %v771
    %v808 = vunpack.c.l.b16 %v772
    %v809 = vunpack.c.l.b16 %v773
    %v810 = vunpack.c.l.b16 %v774
    %v811 = vunpack.c.l.b16 %v775
    %v812 = vpack.c.b16 %v797, %v796
    %v813 = vpack.c.b16 %v799, %v798
    %v814 = vpack.c.b16 %v801, %v800
    %v815 = vpack.c.b16 %v803, %v802
    %v816 = vpack.c.b16 %v805, %v804
    %v817 = vpack.c.b16 %v807, %v806
    %v818 = vpack.c.b16 %v809, %v808
    %v819 = vpack.c.b16 %v811, %v810
    %828 = vmatpush.bf16.msra.mxu0 %v819
    %829 = vmatpush.bf16.msra.mxu0 %v818
    %830 = vmatpush.bf16.msra.mxu0 %v817
    %831 = vmatpush.bf16.msra.mxu0 %v816
    %832 = vmatpush.bf16.msra.mxu0 %v815
    %833 = vmatpush.bf16.msra.mxu0 %v814
    %834 = vmatpush.bf16.msra.mxu0 %v813
    %835 = vmatpush.bf16.msra.mxu0 %v812
    %836 = vmatmul.bf16.gmra.mxu0 %v759
    %v837 = vpop.f32.mrf.mxu0
    %v838 = vadd.f32 %v778, %v837
    %v839 = vpop.f32.mrf.mxu0
    %840 = vdwg.mxu0
    %841 = vst [vmem:[#allocation13] sm:$0xff] %v838
    // Predicated region
    $region62: #{tpu_custom_call.1} parent=1 // pred_check
      _
    $region63: #{tpu_custom_call.1} parent=1 // pred_check_branch
      %843 = sbr.rel (0) target = $region65
    $region64: #{tpu_custom_call.1} parent=1 // pred_region
      %845 = vsyncadd [#allocation4], 0
      %s847 = sshll.u32 [#allocation13], 4
      %s848 = int_to_ptr.vmem [resolvable:$true] %s847
      %s849 = sshll.u32 %s9, 4
      %s850 = int_to_ptr.hbm [resolvable:$true] %s849
      %852 = dma.vmem_to_hbm [thread:$0]  %s848, 128, %s850, [#allocation4]
    $region65: #{tpu_custom_call.1} parent=1 // pred_fallthru
      _
    // Predicated region
    $region66: #{tpu_custom_call.1} parent=1 // pred_check
      _
    $region67: #{tpu_custom_call.1} parent=1 // pred_check_branch
      %854 = sbr.rel (0) target = $region69
    $region68: #{tpu_custom_call.1} parent=1 // pred_region
      %856 = dma.done [#allocation4], 128
    $region69: #{tpu_custom_call.1} parent=1 // pred_fallthru
      _
    %857 = vsyncpa [#allocation3], 1
    %858 = vsyncpa [#allocation6], 1
    %859 = vsyncpa [#allocation9], 1
    %860 = vsyncpa [#allocation12], 1
    %861 = vsyncpa [#allocation4], 1

</llo_original>
